<compile_context>
chip_gen: v6e
topology: v6e:2x2x1
jax: 0.10.0
libtpu: 0.0.40
codegen_flags: <defaults>
</compile_context>

<pallas_src>
import math

import jax
import jax.numpy as jnp
from jax.experimental import pallas as pl
from jax.experimental.pallas import tpu as pltpu


def _gem_kernel(eps, hw):
    inv_hw = 1.0 / float(hw)

    def kernel(p_ref, x_ref, o_ref):
        # learned exponent p lives in SMEM (scalar prefetch); load once per step
        p = p_ref[0]
        inv_p = 1.0 / p

        x = x_ref[...].astype(jnp.float32)
        # clamp(min=eps)
        xc = jnp.maximum(x, eps)
        # x^p via explicit exp/log: exactly 2 EUP ops per element, avoids
        # jnp.power's generic sign/zero handling on the VPU (matters on v5e).
        xp = jnp.exp(p * jnp.log(xc))
        # sum over spatial (lane) axis; fold the 1/HW mean into the per-row
        # finalize, which is negligible (one log+exp per row).
        s = jnp.sum(xp, axis=-1, keepdims=True) * inv_hw
        # mean^(1/p)
        o_ref[...] = jnp.exp(jnp.log(s) * inv_p).astype(o_ref.dtype)

    return kernel


def gem(x, p, eps=1e-6):
    """GEM pooling.

    x: (B, C, H, W) float array (NCHW, same layout as the PyTorch module).
    p: (1,) float array (learned exponent, must be > 0).
    returns: (B, C) array, same dtype as x.
    """
    B, C, H, W = x.shape
    BC, HW = B * C, H * W
    x2d = x.reshape(BC, HW)

    # ---- tile-size selection -------------------------------------------
    itemsize = jnp.dtype(x.dtype).itemsize
    row_mult = 16 if itemsize == 2 else 8  # sublane packing (bf16 packs 2/row)
    # Target ~4 MiB per input buffer (double-buffered by the pipeline), so the
    # working set stays well inside v7x's 32 MiB default-scoped / 64 MiB
    # physical VMEM while still being large enough to hit the HBM roofline.
    target_bytes = 4 * 1024 * 1024
    tm = (target_bytes // max(1, HW * itemsize)) // row_mult * row_mult
    tm = int(max(row_mult, min(1024, tm)))
    bc_rounded = math.ceil(BC / row_mult) * row_mult
    tm = min(tm, bc_rounded)

    # Pad rows so the grid divides evenly. Pad value 1.0 is log/exp-safe; the
    # padded rows are discarded after the call.
    bc_padded = math.ceil(BC / tm) * tm
    if bc_padded != BC:
        pad = jnp.ones((bc_padded - BC, HW), dtype=x2d.dtype)
        x2d = jnp.concatenate([x2d, pad], axis=0)

    grid = (bc_padded // tm,)

    cost = pl.CostEstimate(
        flops=3 * bc_padded * HW,
        transcendentals=2 * bc_padded * HW,
        bytes_accessed=bc_padded * HW * itemsize + bc_padded * itemsize,
    )

    # TODO(synk): if HW is very large (e.g. 224*224), add an inner "arbitrary"
    # grid axis over HW with a (tm, 1) f32 accumulator instead of shrinking tm.
    out2d = pl.pallas_call(
        _gem_kernel(eps, HW),
        out_shape=jax.ShapeDtypeStruct((bc_padded, 1), x.dtype),
        grid_spec=pltpu.PrefetchScalarGridSpec(
            num_scalar_prefetch=1,  # p -> SMEM, available before the grid runs
            grid=grid,
            in_specs=[pl.BlockSpec((tm, HW), lambda i, p_ref: (i, 0))],
            out_specs=pl.BlockSpec((tm, 1), lambda i, p_ref: (i, 0)),
        ),
        compiler_params=pltpu.CompilerParams(
            dimension_semantics=("parallel",),
        ),
        cost_estimate=cost,
    )(p.astype(jnp.float32), x2d)

    return out2d[:BC].reshape(B, C)


def gem_reference(x, p, eps=1e-6):
    # Pure-JAX reference matching the PyTorch forward exactly.
    xc = jnp.maximum(x, eps)
    return jnp.power(jnp.mean(jnp.power(xc, p[0]), axis=(-2, -1)), 1.0 / p[0])


if __name__ == "__main__":
    key = jax.random.PRNGKey(0)
    B, C, H, W = 2, 4, 16, 16
    x = jax.random.normal(key, (B, C, H, W), dtype=jnp.float32)

    # deterministic parameter init: p = 3.0 (as in nn.Parameter(torch.ones(1) * 3))
    p = jnp.ones((1,), dtype=jnp.float32) * 3.0
    eps = 1e-6

    out = gem(x, p, eps)
    jax.block_until_ready(out)

    ref = gem_reference(x, p, eps)
    assert out.shape == (B, C), out.shape
    assert jnp.allclose(out, ref, rtol=1e-4, atol=1e-5), (out, ref)

    print("KERNEL_OK")
</pallas_src>

<mosaic_0001>
module attributes {stable_mosaic.version = 11 : i64} {
  func.func @kernel(%arg0: i32, %arg1: memref<1xf32, #tpu.memory_space<smem>>, %arg2: memref<8x256xf32, #tpu.memory_space<vmem>>, %arg3: memref<8x1xf32, #tpu.memory_space<vmem>>) attributes {dimension_semantics = [#tpu.dimension_semantics<parallel>], iteration_bounds = array<i64: 1>, scalar_prefetch = 1 : i64, scratch_operands = 0 : i64, tpu.core_type = #tpu.core_type<tc>, window_params = [{transform_indices = @transform_0, window_bounds = array<i64: 8, 256>}, {transform_indices = @transform_1, window_bounds = array<i64: 8, 1>}]} {
    %c0 = arith.constant 0 : index
    %0 = memref.load %arg1[%c0] : memref<1xf32, #tpu.memory_space<smem>>
    %cst = arith.constant 1.000000e+00 : f32
    %1 = arith.divf %cst, %0 : f32
    %c0_0 = arith.constant 0 : index
    %c0_1 = arith.constant 0 : index
    %2 = vector.load %arg2[%c0_0, %c0_1] : memref<8x256xf32, #tpu.memory_space<vmem>>, vector<8x256xf32>
    %cst_2 = arith.constant 9.99999997E-7 : f32
    %3 = vector.broadcast %cst_2 : f32 to vector<8x256xf32>
    %4 = arith.maximumf %2, %3 : vector<8x256xf32>
    %5 = math.log %4 : vector<8x256xf32>
    %6 = vector.broadcast %0 : f32 to vector<8x256xf32>
    %7 = arith.mulf %6, %5 : vector<8x256xf32>
    %8 = math.exp %7 : vector<8x256xf32>
    %cst_3 = arith.constant dense<0.000000e+00> : vector<8xf32>
    %9 = vector.multi_reduction <add>, %8, %cst_3 [1] : vector<8x256xf32> to vector<8xf32>
    %10 = vector.shape_cast %9 : vector<8xf32> to vector<8x1xf32>
    %cst_4 = arith.constant 3.906250e-03 : f32
    %11 = vector.broadcast %cst_4 : f32 to vector<8x1xf32>
    %12 = arith.mulf %10, %11 : vector<8x1xf32>
    %13 = math.log %12 : vector<8x1xf32>
    %14 = vector.broadcast %1 : f32 to vector<8x1xf32>
    %15 = arith.mulf %13, %14 : vector<8x1xf32>
    %16 = math.exp %15 : vector<8x1xf32>
    %c0_5 = arith.constant 0 : index
    %c0_6 = arith.constant 0 : index
    %17 = vector.load %arg3[%c0_5, %c0_6] : memref<8x1xf32, #tpu.memory_space<vmem>>, vector<8x1xf32>
    tpu.vector_store %arg3[%c0_5, %c0_6], %16 {strides = array<i32>} : memref<8x1xf32, #tpu.memory_space<vmem>>, vector<8x1xf32>,
    return
  }
  func.func @transform_0(%arg0: i32, %arg1: memref<1xf32, #tpu.memory_space<smem>>) -> (i32, i32) {
    %c0_i32 = arith.constant 0 : i32
    %c0_i32_0 = arith.constant 0 : i32
    return %arg0, %c0_i32 : i32, i32
  }
  func.func @transform_1(%arg0: i32, %arg1: memref<1xf32, #tpu.memory_space<smem>>) -> (i32, i32) {
    %c0_i32 = arith.constant 0 : i32
    %c0_i32_0 = arith.constant 0 : i32
    return %arg0, %c0_i32 : i32, i32
  }
}

</mosaic_0001>

<llo_original>
// kernel: tpu_custom_call.1
$region0: #{tpu_custom_call.1}
  #allocation0 [shape = 'u32[]', space=smem, size = 0x4, offset = 0x4, fixed_abs, tag = 'smem constant byte address 0x4 - core index']
  #allocation1 [shape = 'u32[144,128]{1,0:T(1,128)}', space=vmem, size = 0x12000, scoped, tag = 'internal scratch']
  #allocation2 [shape = 's32[1]{0}', space=sflag, size = 0x4, scoped, tag = 'scoped memory for tpu_custom_call.1']
  #allocation3 [shape = 'f32[1]{0:T(128)S(6)}', space=smem, size = 0x200, scoped, tag = 'prefetched SMEM operand 0']
  %s0 = inlined_call_operand.<no memory space> [shape: f32[1], index: 0, kind: input, shape index: {}]
  %s1 = inlined_call_operand.hbm [shape: f32[8,256], index: 1, kind: input, shape index: {}]
  %s2 = inlined_call_operand.vmem [shape: f32[8,1], index: 2, kind: output, shape index: {}]
  %s3 = sld [smem:[#allocation0]]
  $region18: #{tpu_custom_call.1} parent=0
    _
  %s5 = ssub.s32 1, %s3
  %s6 = scalar_select 0, %s5, %s3
  %7 = sst [smem:[#allocation3]] %s0
  $region1: #{tpu_custom_call.1} parent=0
    #allocation4 [shape = 'u8[8192]{0}', space=vmem, size = 0x2000, scoped, tag = 'input window, operand 1, single buffered']
    #allocation5 [shape = 's32[1]{0}', space=sflag, size = 0x4, scoped, tag = 'scoped memory for tpu_custom_call.1']
    %8 = vsyncpa [#allocation5], 0
    // Predicated region
    $region2: #{tpu_custom_call.1} parent=1 // pred_check
      _
    $region3: #{tpu_custom_call.1} parent=1 // pred_check_branch
      %10 = sbr.rel (0) target = $region5
    $region4: #{tpu_custom_call.1} parent=1 // pred_region
      %s12 = ssub.s32 256, 256
      %13 = vsyncadd [#allocation5], %s12
      %s15 = sshll.u32 [#allocation4], 4
      %s16 = int_to_ptr.vmem [resolvable:$true] %s15
      %18 = dma.hbm_to_vmem [thread:$0]  %s1, 256, %s16, [#allocation5]
    $region5: #{tpu_custom_call.1} parent=1 // pred_fallthru
      _
    // Predicated region
    $region6: #{tpu_custom_call.1} parent=1 // pred_check
      _
    $region7: #{tpu_custom_call.1} parent=1 // pred_check_branch
      %20 = sbr.rel (0) target = $region9
    $region8: #{tpu_custom_call.1} parent=1 // pred_region
      %21 = dma.done [#allocation5], 256
    $region9: #{tpu_custom_call.1} parent=1 // pred_fallthru
      _
    %s22 = sld [smem:[#allocation3]]
    %v23 = vstv %s22
    %v24 = vrcp.pop %v23
    %s25 = vtos %v24
    %v26 = vld [vmem:[#allocation4] sm:$0xff]
    %v27 = vld [vmem:[#allocation4 + $0x8] sm:$0xff]
    %v28 = vmax.f32 %v26, 1e-06
    %v29 = vmax.f32 %v27, 1e-06
    %v30 = vlog2.pop %v28
    %v31 = vmul.f32 %v30, 0.6931472
    %v32 = vlog2.pop %v29
    %v33 = vmul.f32 %v32, 0.6931472
    %v34 = vstv %s22
    %v35 = vmul.f32 %v34, %v31
    %v36 = vmul.f32 %v34, %v33
    %v37 = vmul.f32 %v35, 1.442695
    %v38 = vpow.pop %v37
    %v39 = vmul.f32 %v36, 1.442695
    %v40 = vpow.pop %v39
    %v41 = vadd.f32 %v38, %v40
    %42 = vadd.xlane.f32.xlu0 %v41
    %v43 = vpop.xlane.xlu0 %42
    %v44 = vmul.f32 %v43, 0.00390625
    %v45 = vlog2.pop %v44
    %v46 = vmul.f32 %v45, 0.6931472
    %v47 = vstv %s25
    %v48 = vmul.f32 %v46, %v47
    %v49 = vmul.f32 %v48, 1.442695
    %v50 = vpow.pop %v49
    %vm51 = vcmask 7168
    %52 = vst.msk [vmem:[%s2] sm:$0xff] %vm51, %v50
    // Predicated region
    $region10: #{tpu_custom_call.1} parent=1 // pred_check
      _
    $region11: #{tpu_custom_call.1} parent=1 // pred_check_branch
      %54 = sbr.rel (0) target = $region13
    $region12: #{tpu_custom_call.1} parent=1 // pred_region
      _
    $region13: #{tpu_custom_call.1} parent=1 // pred_fallthru
      _
    // Predicated region
    $region14: #{tpu_custom_call.1} parent=1 // pred_check
      _
    $region15: #{tpu_custom_call.1} parent=1 // pred_check_branch
      %56 = sbr.rel (0) target = $region17
    $region16: #{tpu_custom_call.1} parent=1 // pred_region
      _
    $region17: #{tpu_custom_call.1} parent=1 // pred_fallthru
      _
    %57 = vsyncpa [#allocation5], 1

</llo_original>
